<compile_context>
chip_gen: v5e
topology: v5e:2x2
jax: 0.10.0
libtpu: 0.0.40
codegen_flags: <defaults>
</compile_context>

<pallas_src>
import jax
import jax.numpy as jnp
from jax.experimental import pallas as pl
from jax.experimental.pallas import tpu as pltpu

_EPS = 1e-5
_SLOPE = 0.01


def _crelu_in_kernel(x_ref, gamma_ref, beta_ref, o_ref):
    # x_ref:     (1, C_BLK, HW)   one batch, a slab of input channels
    # gamma_ref: (2, C_BLK, 1)    [0] -> positive half, [1] -> negative half
    # beta_ref:  (2, C_BLK, 1)
    # o_ref:     (1, 2, C_BLK, HW)
    v = x_ref[0].astype(jnp.float32)                       # (C_BLK, HW)
    inv_hw = jnp.float32(1.0 / v.shape[-1])

    # One-pass per-channel stats (biased variance, matches PyTorch InstanceNorm2d).
    s1 = jnp.sum(v, axis=-1, keepdims=True)                # (C_BLK, 1)
    s2 = jnp.sum(v * v, axis=-1, keepdims=True)            # (C_BLK, 1)
    mean = s1 * inv_hw
    var = s2 * inv_hw - mean * mean
    inv = jax.lax.rsqrt(var + _EPS)                        # (C_BLK, 1)

    # Hoisted affine params (broadcast (C_BLK,1) factors built once).
    g = gamma_ref[...].astype(jnp.float32)                 # (2, C_BLK, 1)
    b = beta_ref[...].astype(jnp.float32)

    n = (v - mean) * inv                                   # normalized positive half
    # Negative half: mean(-x) = -mean, var(-x) = var  =>  normalized(-x) = -n.
    y_pos = n * g[0] + b[0]
    y_neg = (-n) * g[1] + b[1]

    o_ref[0, 0, :, :] = jnp.where(y_pos >= 0.0, y_pos, _SLOPE * y_pos).astype(o_ref.dtype)
    o_ref[0, 1, :, :] = jnp.where(y_neg >= 0.0, y_neg, _SLOPE * y_neg).astype(o_ref.dtype)


def _pick_c_block(C, HW, itemsize, target_bytes=2 * 1024 * 1024):
    """Largest channel-slab that (a) divides C, (b) satisfies the (8,128)/full-dim
    block rule on the second-to-last dim, (c) keeps the input tile <= ~2 MiB
    (safe for v7x's smaller VMEM with double-buffered in + 2x out)."""
    cands = [d for d in range(C, 0, -1) if C % d == 0 and (d == C or d % 8 == 0)]
    for d in cands:
        if d * HW * itemsize <= target_bytes:
            return d
    return cands[-1]


def crelu_in(x, gamma, beta):
    """x: (N, C, H, W); gamma/beta: (2C,). Returns (N, 2C, H, W)."""
    N, C, H, W = x.shape
    C2 = 2 * C
    assert gamma.shape == (C2,) and beta.shape == (C2,)
    HW = H * W

    # Lane-dense views: flatten spatial dims; split gamma/beta into the two halves.
    x3 = x.reshape(N, C, HW)
    g2 = gamma.reshape(2, C, 1).astype(jnp.float32)
    b2 = beta.reshape(2, C, 1).astype(jnp.float32)

    c_blk = _pick_c_block(C, HW, jnp.dtype(x.dtype).itemsize)
    grid = (N, C // c_blk)

    out = pl.pallas_call(
        _crelu_in_kernel,
        out_shape=jax.ShapeDtypeStruct((N, 2, C, HW), x.dtype),
        grid=grid,
        in_specs=[
            pl.BlockSpec((1, c_blk, HW), lambda n, cb: (n, cb, 0)),     # x slab
            pl.BlockSpec((2, c_blk, 1), lambda n, cb: (0, cb, 0)),      # gamma halves
            pl.BlockSpec((2, c_blk, 1), lambda n, cb: (0, cb, 0)),      # beta halves
        ],
        out_specs=pl.BlockSpec((1, 2, c_blk, HW), lambda n, cb: (n, 0, cb, 0)),
        compiler_params=pltpu.CompilerParams(
            dimension_semantics=("parallel", "parallel")),
    )(x3, g2, b2)

    # (N, 2, C, HW) -> (N, 2C, H, W): exactly the concat(x, -x) channel order.
    return out.reshape(N, C2, H, W)


def _reference(x, gamma, beta):
    """Pure-JAX reference matching PyTorch semantics."""
    cat = jnp.concatenate([x, -x], axis=1).astype(jnp.float32)
    mean = cat.mean(axis=(2, 3), keepdims=True)
    var = ((cat - mean) ** 2).mean(axis=(2, 3), keepdims=True)
    y = (cat - mean) / jnp.sqrt(var + _EPS)
    y = y * gamma[None, :, None, None] + beta[None, :, None, None]
    return jnp.where(y >= 0.0, y, _SLOPE * y).astype(x.dtype)


if __name__ == "__main__":
    key = jax.random.PRNGKey(0)
    kx, kg, kb = jax.random.split(key, 3)

    N, C, H, W = 2, 4, 16, 16
    x = jax.random.normal(kx, (N, C, H, W), dtype=jnp.float32)
    # PyTorch default affine params are ones/zeros; perturb to exercise the path.
    gamma = 1.0 + 0.1 * jax.random.normal(kg, (2 * C,), dtype=jnp.float32)
    beta = 0.1 * jax.random.normal(kb, (2 * C,), dtype=jnp.float32)

    out = crelu_in(x, gamma, beta)
    out = jax.block_until_ready(out)

    ref = _reference(x, gamma, beta)
    assert out.shape == (N, 2 * C, H, W)
    assert jnp.allclose(out, ref, atol=1e-4, rtol=1e-5), "mismatch vs reference"

    print("KERNEL_OK")
</pallas_src>

<mosaic_0001>
module attributes {stable_mosaic.version = 11 : i64} {
  func.func @_crelu_in_kernel(%arg0: i32, %arg1: i32, %arg2: memref<1x4x256xf32, #tpu.memory_space<vmem>>, %arg3: memref<2x4x1xf32, #tpu.memory_space<vmem>>, %arg4: memref<2x4x1xf32, #tpu.memory_space<vmem>>, %arg5: memref<1x2x4x256xf32, #tpu.memory_space<vmem>>) attributes {dimension_semantics = [#tpu.dimension_semantics<parallel>, #tpu.dimension_semantics<parallel>], iteration_bounds = array<i64: 2, 1>, scalar_prefetch = 0 : i64, scratch_operands = 0 : i64, tpu.core_type = #tpu.core_type<tc>, window_params = [{transform_indices = @transform_0, window_bounds = array<i64: 1, 4, 256>}, {transform_indices = @transform_1, window_bounds = array<i64: 2, 4, 1>}, {transform_indices = @transform_2, window_bounds = array<i64: 2, 4, 1>}, {transform_indices = @transform_3, window_bounds = array<i64: 1, 2, 4, 256>}]} {
    %c0 = arith.constant 0 : index
    %c0_0 = arith.constant 0 : index
    %c0_1 = arith.constant 0 : index
    %0 = vector.load %arg2[%c0, %c0_0, %c0_1] : memref<1x4x256xf32, #tpu.memory_space<vmem>>, vector<1x4x256xf32>
    %1 = vector.shape_cast %0 : vector<1x4x256xf32> to vector<4x256xf32>
    %cst = arith.constant dense<0.000000e+00> : vector<4xf32>
    %2 = vector.multi_reduction <add>, %1, %cst [1] : vector<4x256xf32> to vector<4xf32>
    %3 = vector.shape_cast %2 : vector<4xf32> to vector<4x1xf32>
    %4 = arith.mulf %1, %1 : vector<4x256xf32>
    %cst_2 = arith.constant dense<0.000000e+00> : vector<4xf32>
    %5 = vector.multi_reduction <add>, %4, %cst_2 [1] : vector<4x256xf32> to vector<4xf32>
    %6 = vector.shape_cast %5 : vector<4xf32> to vector<4x1xf32>
    %cst_3 = arith.constant 3.906250e-03 : f32
    %7 = vector.broadcast %cst_3 : f32 to vector<4x1xf32>
    %8 = arith.mulf %3, %7 : vector<4x1xf32>
    %cst_4 = arith.constant 3.906250e-03 : f32
    %9 = vector.broadcast %cst_4 : f32 to vector<4x1xf32>
    %10 = arith.mulf %6, %9 : vector<4x1xf32>
    %11 = arith.mulf %8, %8 : vector<4x1xf32>
    %12 = arith.subf %10, %11 : vector<4x1xf32>
    %cst_5 = arith.constant 9.99999974E-6 : f32
    %13 = vector.broadcast %cst_5 : f32 to vector<4x1xf32>
    %14 = arith.addf %12, %13 : vector<4x1xf32>
    %15 = math.rsqrt %14 : vector<4x1xf32>
    %c0_6 = arith.constant 0 : index
    %c0_7 = arith.constant 0 : index
    %c0_8 = arith.constant 0 : index
    %16 = vector.load %arg3[%c0_6, %c0_7, %c0_8] : memref<2x4x1xf32, #tpu.memory_space<vmem>>, vector<2x4x1xf32>
    %c0_9 = arith.constant 0 : index
    %c0_10 = arith.constant 0 : index
    %c0_11 = arith.constant 0 : index
    %17 = vector.load %arg4[%c0_9, %c0_10, %c0_11] : memref<2x4x1xf32, #tpu.memory_space<vmem>>, vector<2x4x1xf32>
    %18 = vector.broadcast %8 : vector<4x1xf32> to vector<4x256xf32>
    %19 = arith.subf %1, %18 : vector<4x256xf32>
    %20 = vector.broadcast %15 : vector<4x1xf32> to vector<4x256xf32>
    %21 = arith.mulf %19, %20 : vector<4x256xf32>
    %22 = vector.extract_strided_slice %16 {offsets = [0, 0, 0], sizes = [1, 4, 1], strides = [1, 1, 1]} : vector<2x4x1xf32> to vector<1x4x1xf32>
    %23 = vector.shape_cast %22 : vector<1x4x1xf32> to vector<4x1xf32>
    %24 = vector.broadcast %23 : vector<4x1xf32> to vector<4x256xf32>
    %25 = arith.mulf %21, %24 : vector<4x256xf32>
    %26 = vector.extract_strided_slice %17 {offsets = [0, 0, 0], sizes = [1, 4, 1], strides = [1, 1, 1]} : vector<2x4x1xf32> to vector<1x4x1xf32>
    %27 = vector.shape_cast %26 : vector<1x4x1xf32> to vector<4x1xf32>
    %28 = vector.broadcast %27 : vector<4x1xf32> to vector<4x256xf32>
    %29 = arith.addf %25, %28 : vector<4x256xf32>
    %cst_12 = arith.constant 0.000000e+00 : f32
    %30 = vector.broadcast %cst_12 : f32 to vector<4x256xf32>
    %31 = arith.subf %30, %21 : vector<4x256xf32>
    %32 = vector.extract_strided_slice %16 {offsets = [1, 0, 0], sizes = [1, 4, 1], strides = [1, 1, 1]} : vector<2x4x1xf32> to vector<1x4x1xf32>
    %33 = vector.shape_cast %32 : vector<1x4x1xf32> to vector<4x1xf32>
    %34 = vector.broadcast %33 : vector<4x1xf32> to vector<4x256xf32>
    %35 = arith.mulf %31, %34 : vector<4x256xf32>
    %36 = vector.extract_strided_slice %17 {offsets = [1, 0, 0], sizes = [1, 4, 1], strides = [1, 1, 1]} : vector<2x4x1xf32> to vector<1x4x1xf32>
    %37 = vector.shape_cast %36 : vector<1x4x1xf32> to vector<4x1xf32>
    %38 = vector.broadcast %37 : vector<4x1xf32> to vector<4x256xf32>
    %39 = arith.addf %35, %38 : vector<4x256xf32>
    %cst_13 = arith.constant 0.000000e+00 : f32
    %40 = vector.broadcast %cst_13 : f32 to vector<4x256xf32>
    %41 = arith.cmpf oge, %29, %40 : vector<4x256xf32>
    %cst_14 = arith.constant 0.00999999977 : f32
    %42 = vector.broadcast %cst_14 : f32 to vector<4x256xf32>
    %43 = arith.mulf %42, %29 : vector<4x256xf32>
    %44 = arith.select %41, %29, %43 : vector<4x256xi1>, vector<4x256xf32>
    %c0_15 = arith.constant 0 : index
    %c0_16 = arith.constant 0 : index
    %c0_17 = arith.constant 0 : index
    %c0_18 = arith.constant 0 : index
    %45 = vector.load %arg5[%c0_15, %c0_16, %c0_17, %c0_18] : memref<1x2x4x256xf32, #tpu.memory_space<vmem>>, vector<1x1x4x256xf32>
    %46 = vector.shape_cast %45 : vector<1x1x4x256xf32> to vector<4x256xf32>
    %47 = vector.shape_cast %44 : vector<4x256xf32> to vector<1x1x4x256xf32>
    tpu.vector_store %arg5[%c0_15, %c0_16, %c0_17, %c0_18], %47 {strides = array<i32>} : memref<1x2x4x256xf32, #tpu.memory_space<vmem>>, vector<1x1x4x256xf32>,
    %cst_19 = arith.constant 0.000000e+00 : f32
    %48 = vector.broadcast %cst_19 : f32 to vector<4x256xf32>
    %49 = arith.cmpf oge, %39, %48 : vector<4x256xf32>
    %cst_20 = arith.constant 0.00999999977 : f32
    %50 = vector.broadcast %cst_20 : f32 to vector<4x256xf32>
    %51 = arith.mulf %50, %39 : vector<4x256xf32>
    %52 = arith.select %49, %39, %51 : vector<4x256xi1>, vector<4x256xf32>
    %c0_21 = arith.constant 0 : index
    %c1 = arith.constant 1 : index
    %c0_22 = arith.constant 0 : index
    %c0_23 = arith.constant 0 : index
    %53 = vector.load %arg5[%c0_21, %c1, %c0_22, %c0_23] : memref<1x2x4x256xf32, #tpu.memory_space<vmem>>, vector<1x1x4x256xf32>
    %54 = vector.shape_cast %53 : vector<1x1x4x256xf32> to vector<4x256xf32>
    %55 = vector.shape_cast %52 : vector<4x256xf32> to vector<1x1x4x256xf32>
    tpu.vector_store %arg5[%c0_21, %c1, %c0_22, %c0_23], %55 {strides = array<i32>} : memref<1x2x4x256xf32, #tpu.memory_space<vmem>>, vector<1x1x4x256xf32>,
    return
  }
  func.func @transform_0(%arg0: i32, %arg1: i32) -> (i32, i32, i32) {
    %c0_i32 = arith.constant 0 : i32
    %c0_i32_0 = arith.constant 0 : i32
    return %arg0, %arg1, %c0_i32 : i32, i32, i32
  }
  func.func @transform_1(%arg0: i32, %arg1: i32) -> (i32, i32, i32) {
    %c0_i32 = arith.constant 0 : i32
    %c0_i32_0 = arith.constant 0 : i32
    %c0_i32_1 = arith.constant 0 : i32
    return %c0_i32, %arg1, %c0_i32_0 : i32, i32, i32
  }
  func.func @transform_2(%arg0: i32, %arg1: i32) -> (i32, i32, i32) {
    %c0_i32 = arith.constant 0 : i32
    %c0_i32_0 = arith.constant 0 : i32
    %c0_i32_1 = arith.constant 0 : i32
    return %c0_i32, %arg1, %c0_i32_0 : i32, i32, i32
  }
  func.func @transform_3(%arg0: i32, %arg1: i32) -> (i32, i32, i32, i32) {
    %c0_i32 = arith.constant 0 : i32
    %c0_i32_0 = arith.constant 0 : i32
    %c0_i32_1 = arith.constant 0 : i32
    return %arg0, %c0_i32, %arg1, %c0_i32_0 : i32, i32, i32, i32
  }
}

</mosaic_0001>

<llo_original>
// kernel: tpu_custom_call.1
$region0: #{tpu_custom_call.1}
  #allocation0 [shape = 'u32[]', space=smem, size = 0x4, offset = 0x4, fixed_abs, tag = 'smem constant byte address 0x4 - core index']
  #allocation1 [shape = 'u32[72,128]{1,0:T(1,128)}', space=vmem, size = 0x9000, scoped, tag = 'internal scratch']
  %s0 = inlined_call_operand.vmem [shape: f32[2,4,256], index: 0, kind: input, shape index: {}]
  %s1 = inlined_call_operand.vmem [shape: f32[2,4,1], index: 1, kind: input, shape index: {}]
  %s2 = inlined_call_operand.vmem [shape: f32[2,4,1], index: 2, kind: input, shape index: {}]
  %s3 = inlined_call_operand.hbm [shape: f32[2,2,4,256], index: 3, kind: output, shape index: {}]
  %s4 = sld [smem:[#allocation0]]
  $region45: #{tpu_custom_call.1} parent=0
    _
  %s6 = ssub.s32 1, %s4
  %s7 = scalar_select 0, %s6, %s4
  $region1: #{tpu_custom_call.1} parent=0
    #allocation2 [shape = 'u8[16384]{0}', space=vmem, size = 0x4000, scoped, tag = 'output window, operand 0']
    #allocation3 [shape = 's32[2]{0}', space=sflag, size = 0x8, scoped, tag = 'scoped memory for tpu_custom_call.1']
    %8 = vsyncpa [#allocation3], 0
    %s9 = scalar_lea.sflag [#allocation3], 1
    %10 = vsyncpa %s9, 0
    loop: start=0, step=1, limit=4
    $region2: #{tpu_custom_call.1} parent=1 // loop_pre_header
      _
    $region3: #{tpu_custom_call.1} parent=1 // loop_header
      %s12 = sphi 0, %s16
      %p13 = scmp.ge.s32.totalorder %s12, 4
      %s19 = sphi 0, %s31
      %s20 = sphi 0, %s27
      %s21 = sphi 0, %s19
      %s22 = sphi 0, %s20
      %s23 = sphi 0, %s21
      %s24 = sphi 0, %s22
      %s36 = sphi 0, %s38
      %s39 = sphi 0, %s36
      %s40 = sphi 0, %s39
      %s56 = sphi 0, %s40
      %s62 = sphi 0, %s64
      %s65 = sphi 0, %s62
      %s66 = sphi 0, %s65
      %s82 = sphi 0, %s66
      %s88 = sphi 0, %s90
      %s91 = sphi 0, %s88
      %s92 = sphi 0, %s91
      %s108 = sphi 0, %s92
      %s116 = sphi 0, %s118
      %s119 = sphi 0, %s116
      %s120 = sphi 0, %s119
      %s136 = sphi 0, %s120
    $region4: #{tpu_custom_call.1} parent=1 // loop_header_branch
      %15 = sbr.rel (%p13) target = $region8
    $region5: #{tpu_custom_call.1} parent=1 // loop_body
      %s17 = ssub.s32 %s12, 1
      %s18 = ssub.s32 %s12, 2
      %s25 = sadd.s32 1, %s20
      %p26 = scmp.ge.s32.totalorder %s25, 1
      %s27 = scalar_select %p26, 0, %s25
      %s28 = sadd.s32 1, %s19
      %s29 = scalar_select %p26, %s28, %s19
      %p30 = scmp.ge.s32.totalorder %s29, 2
      %s31 = scalar_select %p30, 0, %s29
      %s32 = ssub.s32 %s19, %s31
      %s33 = ssub.s32 %s20, %s27
      %s34 = sor.u32 %s32, %s33
      %p35 = scmp.eq.s32.totalorder %s34, 0
      %s37 = sadd.s32 %s36, 1
      %s38 = scalar_select %p35, %s36, %s37
      %p41 = pneg %p35
      %p42 = scmp.eq.s32.totalorder %s12, 1
      %p43 = por %p41, %p42
      %p44 = scmp.ne.s32.totalorder %s36, %s39
      %p45 = scmp.eq.s32.totalorder %s12, 0
      %p46 = por %p44, %p45
      %p47 = scmp.ne.s32.totalorder %s36, %s39
      %p48 = scmp.eq.s32.totalorder %s17, 1
      %p49 = por %p47, %p48
      %p50 = scmp.ne.s32.totalorder %s39, %s40
      %p51 = scmp.eq.s32.totalorder %s17, 0
      %p52 = por %p50, %p51
      %p53 = scmp.ne.s32.totalorder %s39, %s40
      %p54 = scmp.eq.s32.totalorder %s18, 1
      %p55 = por %p53, %p54
      %p57 = scmp.ne.s32.totalorder %s40, %s56
      %p58 = scmp.eq.s32.totalorder %s18, 0
      %p59 = por %p57, %p58
      %s60 = ssub.s32 %s20, %s27
      %p61 = scmp.eq.s32.totalorder %s60, 0
      %s63 = sadd.s32 %s62, 1
      %s64 = scalar_select %p61, %s62, %s63
      %p67 = pneg %p61
      %p68 = scmp.eq.s32.totalorder %s12, 1
      %p69 = por %p67, %p68
      %p70 = scmp.ne.s32.totalorder %s62, %s65
      %p71 = scmp.eq.s32.totalorder %s12, 0
      %p72 = por %p70, %p71
      %p73 = scmp.ne.s32.totalorder %s62, %s65
      %p74 = scmp.eq.s32.totalorder %s17, 1
      %p75 = por %p73, %p74
      %p76 = scmp.ne.s32.totalorder %s65, %s66
      %p77 = scmp.eq.s32.totalorder %s17, 0
      %p78 = por %p76, %p77
      %p79 = scmp.ne.s32.totalorder %s65, %s66
      %p80 = scmp.eq.s32.totalorder %s18, 1
      %p81 = por %p79, %p80
      %p83 = scmp.ne.s32.totalorder %s66, %s82
      %p84 = scmp.eq.s32.totalorder %s18, 0
      %p85 = por %p83, %p84
      %s86 = ssub.s32 %s20, %s27
      %p87 = scmp.eq.s32.totalorder %s86, 0
      %s89 = sadd.s32 %s88, 1
      %s90 = scalar_select %p87, %s88, %s89
      %p93 = pneg %p87
      %p94 = scmp.eq.s32.totalorder %s12, 1
      %p95 = por %p93, %p94
      %p96 = scmp.ne.s32.totalorder %s88, %s91
      %p97 = scmp.eq.s32.totalorder %s12, 0
      %p98 = por %p96, %p97
      %p99 = scmp.ne.s32.totalorder %s88, %s91
      %p100 = scmp.eq.s32.totalorder %s17, 1
      %p101 = por %p99, %p100
      %p102 = scmp.ne.s32.totalorder %s91, %s92
      %p103 = scmp.eq.s32.totalorder %s17, 0
      %p104 = por %p102, %p103
      %p105 = scmp.ne.s32.totalorder %s91, %s92
      %p106 = scmp.eq.s32.totalorder %s18, 1
      %p107 = por %p105, %p106
      %p109 = scmp.ne.s32.totalorder %s92, %s108
      %p110 = scmp.eq.s32.totalorder %s18, 0
      %p111 = por %p109, %p110
      %s112 = ssub.s32 %s19, %s31
      %s113 = ssub.s32 %s20, %s27
      %s114 = sor.u32 %s112, %s113
      %p115 = scmp.eq.s32.totalorder %s114, 0
      %s117 = sadd.s32 %s116, 1
      %s118 = scalar_select %p115, %s116, %s117
      %p121 = pneg %p115
      %p122 = scmp.eq.s32.totalorder %s12, 1
      %p123 = por %p121, %p122
      %p124 = scmp.ne.s32.totalorder %s116, %s119
      %p125 = scmp.eq.s32.totalorder %s12, 0
      %p126 = por %p124, %p125
      %p127 = scmp.ne.s32.totalorder %s116, %s119
      %p128 = scmp.eq.s32.totalorder %s17, 1
      %p129 = por %p127, %p128
      %p130 = scmp.ne.s32.totalorder %s119, %s120
      %p131 = scmp.eq.s32.totalorder %s17, 0
      %p132 = por %p130, %p131
      %p133 = scmp.ne.s32.totalorder %s119, %s120
      %p134 = scmp.eq.s32.totalorder %s18, 1
      %p135 = por %p133, %p134
      %p137 = scmp.ne.s32.totalorder %s120, %s136
      %p138 = scmp.eq.s32.totalorder %s18, 0
      %p139 = por %p137, %p138
      %p140 = scmp.le.s32.totalorder 1, %s12
      %p141 = scmp.lt.s32.totalorder %s12, 3
      %p142 = pnand %p140, %p141
      %p143 = pneg %p142
      // Predicated region
      $region9: #{tpu_custom_call.1} parent=5 // pred_check
        _
      $region10: #{tpu_custom_call.1} parent=5 // pred_check_branch
        %145 = sbr.rel (%p142) target = $region12
      $region11: #{tpu_custom_call.1} parent=5 // pred_region
        %s146 = ssub.s32 %s12, 1
        // Predicated region
        $region13: #{tpu_custom_call.1} parent=11 // pred_check
          %p147 = pneg %p78
        $region14: #{tpu_custom_call.1} parent=11 // pred_check_branch
          %149 = sbr.rel (%p147) target = $region16
        $region15: #{tpu_custom_call.1} parent=11 // pred_region
          %p150 = scmp.lt.s32.totalorder %s22, 0
          %s151 = scalar_select %p150, %s22, 0
          %s152 = smul.addr %s151, 4
          %s153 = scalar_lea.vmem %s1, %s152
        $region16: #{tpu_custom_call.1} parent=11 // pred_fallthru
          _
        // Predicated region
        $region17: #{tpu_custom_call.1} parent=11 // pred_check
          %p154 = pneg %p104
        $region18: #{tpu_custom_call.1} parent=11 // pred_check_branch
          %156 = sbr.rel (%p154) target = $region20
        $region19: #{tpu_custom_call.1} parent=11 // pred_region
          %p157 = scmp.lt.s32.totalorder %s22, 0
          %s158 = scalar_select %p157, %s22, 0
          %s159 = smul.addr %s158, 4
          %s160 = scalar_lea.vmem %s2, %s159
        $region20: #{tpu_custom_call.1} parent=11 // pred_fallthru
          _
      $region12: #{tpu_custom_call.1} parent=5 // pred_fallthru
        _
      %p161 = scmp.lt.s32.totalorder %s12, 2
      // Predicated region
      $region21: #{tpu_custom_call.1} parent=5 // pred_check
        %p162 = pneg %p161
      $region22: #{tpu_custom_call.1} parent=5 // pred_check_branch
        %164 = sbr.rel (%p162) target = $region24
      $region23: #{tpu_custom_call.1} parent=5 // pred_region
        // Predicated region
        $region25: #{tpu_custom_call.1} parent=23 // pred_check
          %p165 = pneg %p46
        $region26: #{tpu_custom_call.1} parent=23 // pred_check_branch
          %167 = sbr.rel (%p165) target = $region28
        $region27: #{tpu_custom_call.1} parent=23 // pred_region
          %p168 = scmp.lt.s32.totalorder %s19, 1
          %s169 = scalar_select %p168, %s19, 1
          %p170 = scmp.lt.s32.totalorder %s20, 0
          %s171 = scalar_select %p170, %s20, 0
          %s172 = smul.addr %s171, 2
          %s173 = smul.addr %s169, 2
          %s174 = sadd.s32 %s172, %s173
          %s175 = smul.addr %s174, 4
          %s176 = scalar_lea.vmem %s0, %s175
        $region28: #{tpu_custom_call.1} parent=23 // pred_fallthru
          _
      $region24: #{tpu_custom_call.1} parent=5 // pred_fallthru
        _
      %p177 = scmp.le.s32.totalorder 1, %s12
      %p178 = scmp.lt.s32.totalorder %s12, 3
      %p179 = pnand %p177, %p178
      %p180 = pneg %p179
      // Predicated region
      $region29: #{tpu_custom_call.1} parent=5 // pred_check
        _
      $region30: #{tpu_custom_call.1} parent=5 // pred_check_branch
        %182 = sbr.rel (%p179) target = $region32
      $region31: #{tpu_custom_call.1} parent=5 // pred_region
        %s183 = ssub.s32 %s12, 1
        %p184 = scmp.lt.s32.totalorder %s21, 1
        %s185 = scalar_select %p184, %s21, 1
        %p186 = scmp.lt.s32.totalorder %s22, 0
        %s187 = scalar_select %p186, %s22, 0
        %s188 = smul.addr %s187, 2
        %s189 = smul.addr %s185, 2
        %s190 = sadd.s32 %s188, %s189
        %s191 = smul.addr %s190, 4
        %s192 = scalar_lea.vmem %s0, %s191
        %p193 = pneg %p52
        %p194 = pneg %p49
        %p195 = scmp.lt.s32.totalorder %s22, 0
        %s196 = scalar_select %p195, %s22, 0
        %s197 = smul.addr %s196, 4
        %s198 = scalar_lea.vmem %s1, %s197
        %p199 = pneg %p78
        %p200 = pneg %p75
        %p201 = scmp.lt.s32.totalorder %s22, 0
        %s202 = scalar_select %p201, %s22, 0
        %s203 = smul.addr %s202, 4
        %s204 = scalar_lea.vmem %s2, %s203
        %p205 = pneg %p104
        %p206 = pneg %p101
        %p207 = pneg %p132
        %p208 = pneg %p129
        %s209 = sand.u32 %s119, 1
        %s210 = scalar_lea.sflag [#allocation3], %s209
        %s211 = sand.u32 %s119, 1
        %s212 = smul.addr %s211, 16
        %s213 = scalar_lea.vmem [#allocation2], %s212
        %p214 = scmp.lt.s32.totalorder %s21, 1
        %s215 = scalar_select %p214, %s21, 1
        %p216 = scmp.lt.s32.totalorder %s22, 0
        %s217 = scalar_select %p216, %s22, 0
        %s218 = smul.addr %s217, 2
        %s219 = smul.addr %s215, 2
        %s220 = sadd.s32 %s218, %s219
        %s221 = smul.addr %s220, 4
        %s222 = scalar_lea.vmem %s0, %s221
        %p223 = scmp.lt.s32.totalorder %s22, 0
        %s224 = scalar_select %p223, %s22, 0
        %s225 = smul.addr %s224, 4
        %s226 = scalar_lea.vmem %s1, %s225
        %p227 = scmp.lt.s32.totalorder %s22, 0
        %s228 = scalar_select %p227, %s22, 0
        %s229 = smul.addr %s228, 4
        %s230 = scalar_lea.vmem %s2, %s229
        %v231 = vld [vmem:[%s222] sm:$0xff]
        %233 = vst [vmem:[#allocation1] ss:$2 sm:$0xff] %v231
        %v234 = vld.sshfl [vmem:[#allocation1] sm:$0xff pattern:$0x75316420]
        %v235 = vld.sshfl [vmem:[#allocation1 + $0x8] sm:$0xff pattern:$0x75316420]
        %vm238 = vcmask 1043456
        %v239 = vsel %vm238, %v234, 0.0
        %v240 = vsel %vm238, %v235, 0.0
        %v241 = vadd.f32 %v239, %v240
        %242 = vadd.xlane.f32.xlu0 %v241
        %v243 = vpop.xlane.xlu0 %242
        %v244 = vmul.f32 %v231, %v231
        %246 = vst [vmem:[#allocation1] ss:$2 sm:$0xff] %v244
        %v247 = vld.sshfl [vmem:[#allocation1] sm:$0xff pattern:$0x75316420]
        %v248 = vld.sshfl [vmem:[#allocation1 + $0x8] sm:$0xff pattern:$0x75316420]
        %v251 = vsel %vm238, %v247, 0.0
        %v252 = vsel %vm238, %v248, 0.0
        %v253 = vadd.f32 %v251, %v252
        %254 = vadd.xlane.f32.xlu0 %v253
        %v255 = vpop.xlane.xlu0 %254
        %v256 = vmul.f32 %v243, 0.00390625
        %v257 = vmul.f32 %v255, 0.00390625
        %v258 = vmul.f32 %v256, %v256
        %v259 = vsub.f32 %v257, %v258
        %v260 = vadd.f32 %v259, 1e-05
        %v261 = vrsqrt.pop %v260
        %v262 = vmul.f32 %v261, %v260
        %v263 = vmul.f32 %v262, %v261
        %v264 = vmul.f32 0.5, %v263
        %v265 = vsub.f32 1.5, %v264
        %v266 = vmul.f32 %v261, %v265
        %vm267 = vweird.f32 %v260
        %vm268 = vweird.f32 %v261
        %vm269 = vmor %vm267, %vm268
        %v270 = vsel %vm269, %v261, %v266
        %v271 = vld [vmem:[%s226] sm:$0xf]
        %v272 = vld [vmem:[%s226 + $0x4] sm:$0xf]
        %v273 = vld [vmem:[%s230] sm:$0xf]
        %v274 = vld [vmem:[%s230 + $0x4] sm:$0xf]
        %v277 = vunpack.c.l.s4 839922192
        %v278 = vunpack.c.0.s8 %v277
        %v279 = vperm.slane %v256, %v278
        %v281 = vsub.f32 %v231, %v279
        %v284 = vunpack.c.l.s4 839922192
        %v285 = vunpack.c.0.s8 %v284
        %v286 = vperm.slane %v270, %v285
        %v288 = vmul.f32 %v281, %v286
        %290 = vset.pattern.permute.xlu0 0
        %291 = vperm.xlu0 %290, %v271
        %v292 = vpop.permute.xlu0 %291
        %v294 = vunpack.c.l.s4 839922192
        %v295 = vunpack.c.0.s8 %v294
        %v296 = vperm.slane %v292, %v295
        %v298 = vmul.f32 %v288, %v296
        %300 = vset.pattern.permute.xlu0 0
        %301 = vperm.xlu0 %300, %v273
        %v302 = vpop.permute.xlu0 %301
        %v304 = vunpack.c.l.s4 839922192
        %v305 = vunpack.c.0.s8 %v304
        %v306 = vperm.slane %v302, %v305
        %v308 = vadd.f32 %v298, %v306
        %v309 = vsub.f32 0.0, %v288
        %311 = vset.pattern.permute.xlu0 0
        %312 = vperm.xlu0 %311, %v272
        %v313 = vpop.permute.xlu0 %312
        %v315 = vunpack.c.l.s4 839922192
        %v316 = vunpack.c.0.s8 %v315
        %v317 = vperm.slane %v313, %v316
        %v319 = vmul.f32 %v309, %v317
        %321 = vset.pattern.permute.xlu0 0
        %322 = vperm.xlu0 %321, %v274
        %v323 = vpop.permute.xlu0 %322
        %v325 = vunpack.c.l.s4 839922192
        %v326 = vunpack.c.0.s8 %v325
        %v327 = vperm.slane %v323, %v326
        %v329 = vadd.f32 %v319, %v327
        %vm330 = vcmp.ge.f32.partialorder %v308, 0.0
        %v331 = vmul.f32 %v308, 0.01
        %v332 = vsel %vm330, %v308, %v331
        %333 = vst [vmem:[%s213] sm:$0xff] %v332
        %vm334 = vcmp.ge.f32.partialorder %v329, 0.0
        %v335 = vmul.f32 %v329, 0.01
        %v336 = vsel %vm334, %v329, %v335
        %s337 = scalar_lea.vmem %s213, 8 [#allocation2]
        %338 = vst [vmem:[%s337] sm:$0xff] %v336
        %s339 = sand.u32 %s119, 1
        %s340 = scalar_lea.sflag [#allocation3], %s339
        %s341 = sand.u32 %s119, 1
        %s342 = smul.addr %s341, 16
        %s343 = scalar_lea.vmem [#allocation2], %s342
        // Predicated region
        $region33: #{tpu_custom_call.1} parent=31 // pred_check
          %p344 = pneg %p129
        $region34: #{tpu_custom_call.1} parent=31 // pred_check_branch
          %346 = sbr.rel (%p344) target = $region36
        $region35: #{tpu_custom_call.1} parent=31 // pred_region
          %348 = vsyncadd %s340, 0
          %s349 = smul.addr %s22, 2
          %s350 = smul.addr %s21, 4
          %s351 = sadd.s32 %s349, %s350
          %s352 = smul.addr %s351, 4
          %s353 = scalar_lea.hbm %s3, %s352
          %s354 = sshll.u32 %s343, 4
          %s355 = int_to_ptr.vmem [resolvable:$true] %s354
          %s356 = sshll.u32 %s353, 4
          %s357 = int_to_ptr.hbm [resolvable:$true] %s356
          %362 = dma.vmem_to_hbm [thread:$0]  %s355, 256, %s357, %s340, 128, 128, 8
        $region36: #{tpu_custom_call.1} parent=31 // pred_fallthru
          _
      $region32: #{tpu_custom_call.1} parent=5 // pred_fallthru
        _
      %p363 = scmp.le.s32.totalorder 2, %s12
      // Predicated region
      $region37: #{tpu_custom_call.1} parent=5 // pred_check
        %p364 = pneg %p363
      $region38: #{tpu_custom_call.1} parent=5 // pred_check_branch
        %366 = sbr.rel (%p364) target = $region40
      $region39: #{tpu_custom_call.1} parent=5 // pred_region
        %s367 = ssub.s32 %s12, 2
        // Predicated region
        $region41: #{tpu_custom_call.1} parent=39 // pred_check
          %p368 = pneg %p135
        $region42: #{tpu_custom_call.1} parent=39 // pred_check_branch
          %370 = sbr.rel (%p368) target = $region44
        $region43: #{tpu_custom_call.1} parent=39 // pred_region
          %s371 = sand.u32 %s120, 1
          %s372 = scalar_lea.sflag [#allocation3], %s371
          %s373 = sand.u32 %s120, 1
          %s374 = smul.addr %s373, 16
          %s375 = scalar_lea.vmem [#allocation2], %s374
          %377 = dma.done %s372, 256
        $region44: #{tpu_custom_call.1} parent=39 // pred_fallthru
          _
      $region40: #{tpu_custom_call.1} parent=5 // pred_fallthru
        _
    $region6: #{tpu_custom_call.1} parent=1 // loop_footer
      %s16 = sadd.s32 1, %s12
    $region7: #{tpu_custom_call.1} parent=1 // loop_footer_branch
      %11 = sbr.rel target = $region3
    $region8: #{tpu_custom_call.1} parent=1 // loop_exit
      _
    %378 = vsyncpa [#allocation3], 1
    %s379 = scalar_lea.sflag [#allocation3], 1
    %380 = vsyncpa %s379, 1

</llo_original>
